<compile_context>
chip_gen: v7x
topology: tpu7x:2x2x1
jax: 0.10.0
libtpu: 0.0.40
codegen_flags: <defaults>
</compile_context>

<pallas_src>
import jax
import jax.numpy as jnp
from jax import lax
from jax.experimental import pallas as pl
from jax.experimental.pallas import tpu as pltpu

ALPHA = 0.25
GAMMA = 2.0            # the kernel hard-codes gamma == 2 as q*q (no pow)
LANES = 128
ROW_ALIGN = 16         # keeps blocks (8,128)-aligned for f32 and (16,128) for bf16
MAX_TILE_ROWS = 8192   # 8192 x 128 x f32 = 4 MiB per input block (8 MiB DMA / step)

# Neutral lane-tail padding that yields *exactly* zero loss:
#   x = +1e4, t = 1  ->  bce = 1e4 - 1e4 + log1p(exp(-1e4)) = 0
#                        p_t = exp(0) = 1, q = 0  =>  loss = 0
_PAD_LOGIT = 1.0e4
_PAD_TARGET = 1.0

_ARBITRARY = getattr(pltpu, "ARBITRARY", "arbitrary")
_PARALLEL = getattr(pltpu, "PARALLEL", "parallel")
_CORE_PARALLEL = getattr(pltpu, "CORE_PARALLEL", _PARALLEL)


def _cdiv(a, b):
    return -(-a // b)


def _round_up(v, m):
    return _cdiv(v, m) * m


def _tensorcore_split():
    """Best-effort TensorCore count per Pallas device (conservative: default 1)."""
    try:
        kind = jax.devices()[0].device_kind.lower()
    except Exception:
        return 1, None
    if "v7" in kind or "7x" in kind:
        # v7x: 2 TensorCores per chip; only CORE_PARALLEL actually shards the grid.
        return 2, _CORE_PARALLEL
    if "v4" in kind or "v5p" in kind:
        # Megacore chips: "parallel" axes are sharded across the two cores.
        return 2, _PARALLEL
    # v5e / v6e: single TensorCore -> splitting is pure overhead.
    return 1, None


def _make_kernel(*, n_splits, steps, block_rows, valid_rows):
    assert GAMMA == 2.0, "kernel hard-codes gamma == 2 as q*q"
    covered = n_splits * steps * block_rows
    needs_mask = covered > valid_rows          # only the trailing block can overrun
    a0 = 1.0 - ALPHA                           # alpha_t = a0 + a1 * t  (= 0.75 - 0.5*t)
    a1 = 2.0 * ALPHA - 1.0

    def kernel(x_ref, t_ref, o_ref):
        if n_splits > 1:
            step = pl.program_id(1)
            blk = pl.program_id(0) * steps + step
        else:
            step = pl.program_id(0)
            blk = step

        # The output block index is constant along the reduction axis, so the
        # small (8,128) f32 output tile stays resident in VMEM and doubles as
        # the accumulator (no block-sized scratch, no per-step XLU reduce).
        @pl.when(step == 0)
        def _():
            o_ref[...] = jnp.zeros_like(o_ref)

        x = x_ref[...].astype(jnp.float32)
        t = t_ref[...].astype(jnp.float32)

        # Numerically stable BCE-with-logits (== F.binary_cross_entropy_with_logits):
        #   bce = max(x, 0) - x*t + log1p(exp(-|x|))
        e = jnp.exp(-jnp.abs(x))
        bce = jnp.maximum(x, 0.0) - x * t + jnp.log1p(e)
        # p_t kept as exp(-bce) (NOT a sigmoid fast path) so soft / non-binary
        # targets behave exactly like the PyTorch module.
        p_t = jnp.exp(-bce)
        alpha_t = a0 + a1 * t
        q = 1.0 - p_t
        loss = alpha_t * (q * q) * bce         # (1 - p_t)**2 without pow (no NaN at q==0)

        if needs_mask:
            # The trailing partial block reads unspecified data past row
            # `valid_rows`; zero those rows before accumulating.
            start_row = blk * block_rows
            row_ids = lax.broadcasted_iota(jnp.int32, (block_rows, LANES), 0)
            loss = jnp.where(row_ids < (valid_rows - start_row), loss, 0.0)

        # Per-step partial reduction down to one (8,128) tile: the reshape is
        # (8,128)-tile aligned (block_rows % 8 == 0) so this is pure VPU adds.
        psum = jnp.sum(loss.reshape(-1, 8, LANES), axis=0)
        o_ref[...] += psum.reshape(o_ref.shape)

    return kernel


def focal_loss_pallas(inputs, targets, *, max_tile_rows=MAX_TILE_ROWS):
    """inputs/targets: float arrays of identical shape. Returns scalar mean focal loss (f32)."""
    assert inputs.shape == targets.shape
    n = int(inputs.size)
    assert n > 0

    # ---- lane-dense (rows, 128) slab; pad only the <128-element lane tail ----
    flat_x = inputs.reshape(-1)
    flat_t = targets.reshape(-1)
    lane_pad = (-n) % LANES
    if lane_pad:
        # TODO(synk): only taken when n % 128 != 0; XLA still copies the array
        # for this tiny pad — unavoidable with pure-JAX reshaping to 2-D.
        flat_x = jnp.pad(flat_x, (0, lane_pad), constant_values=_PAD_LOGIT)
        flat_t = jnp.pad(flat_t, (0, lane_pad), constant_values=_PAD_TARGET)
    rows = (n + lane_pad) // LANES
    x2d = flat_x.reshape(rows, LANES)
    t2d = flat_t.reshape(rows, LANES)

    def plan(ns):
        rps = _cdiv(rows, ns)
        st = max(1, _cdiv(rps, max_tile_rows))
        br = _round_up(_cdiv(rps, st), ROW_ALIGN)
        st = _cdiv(rps, br)        # re-derive so no block starts past its split's share
        return st, br

    def run(ns, split_sem):
        steps, block_rows = plan(ns)
        kernel = _make_kernel(n_splits=ns, steps=steps,
                              block_rows=block_rows, valid_rows=rows)

        # Double-buffered input blocks + slack; above v5e's 16 MiB default,
        # below v7x's 64 MiB physical VMEM per core.
        per_step_bytes = block_rows * LANES * (x2d.dtype.itemsize + t2d.dtype.itemsize)
        vmem_limit = int(min(max(2 * per_step_bytes + (4 << 20), 16 << 20), 48 << 20))

        if ns > 1:
            grid = (ns, steps)
            in_spec = pl.BlockSpec((block_rows, LANES),
                                   lambda c, i: (c * steps + i, 0))
            out_spec = pl.BlockSpec((1, 8, LANES), lambda c, i: (c, 0, 0))
            out_shape = jax.ShapeDtypeStruct((ns, 8, LANES), jnp.float32)
            dim_sem = (split_sem, _ARBITRARY)
        else:
            grid = (steps,)
            in_spec = pl.BlockSpec((block_rows, LANES), lambda i: (i, 0))
            out_spec = pl.BlockSpec((8, LANES), lambda i: (0, 0))
            out_shape = jax.ShapeDtypeStruct((8, LANES), jnp.float32)
            dim_sem = (_ARBITRARY,)

        call = pl.pallas_call(
            kernel,
            out_shape=out_shape,
            grid_spec=pltpu.PrefetchScalarGridSpec(
                num_scalar_prefetch=0,
                grid=grid,
                in_specs=[in_spec, in_spec],
                out_specs=out_spec,
            ),
            compiler_params=pltpu.CompilerParams(
                dimension_semantics=dim_sem,
                vmem_limit_bytes=vmem_limit,
            ),
        )
        return call(x2d, t2d)

    n_splits, split_sem = _tensorcore_split()
    if n_splits > 1:
        steps, block_rows = plan(n_splits)
        if (n_splits * steps - 1) * block_rows >= rows:
            n_splits = 1           # degenerate split: a block would be fully out of bounds

    if n_splits == 1:
        partials = run(1, None)
    else:
        try:
            partials = run(n_splits, split_sem)
        except Exception:
            # Conservative fallback (e.g. core-parallel grids unsupported on
            # this chip / jax build): run the proven single-core layout.
            partials = run(1, None)

    return jnp.sum(partials) / jnp.float32(n)


def focal_loss_ref(inputs, targets):
    x = inputs.astype(jnp.float32)
    t = targets.astype(jnp.float32)
    bce = jnp.maximum(x, 0.0) - x * t + jnp.log1p(jnp.exp(-jnp.abs(x)))
    p_t = jnp.exp(-bce)
    alpha = (1.0 - ALPHA) + t * (2.0 * ALPHA - 1.0)
    return jnp.mean(alpha * (1.0 - p_t) ** GAMMA * bce)


if __name__ == "__main__":
    key = jax.random.PRNGKey(0)
    k1, k2, k3, k4, k5, k6 = jax.random.split(key, 6)

    # 1) NCHW logits + binary targets (clean path: no pad, no mask, one block).
    x = jax.random.normal(k1, (2, 4, 16, 16), dtype=jnp.float32)
    t = jax.random.bernoulli(k2, p=0.3, shape=(2, 4, 16, 16)).astype(jnp.float32)
    loss = focal_loss_pallas(x, t)
    jax.block_until_ready(loss)
    ref = focal_loss_ref(x, t)
    assert jnp.allclose(loss, ref, rtol=1e-5, atol=1e-6), (loss, ref)

    # 2) Ragged size: lane-tail pad + partial trailing block (in-kernel row mask).
    x2 = jax.random.normal(k3, (2, 3, 5, 91), dtype=jnp.float32)
    t2 = jax.random.bernoulli(k4, p=0.3, shape=(2, 3, 5, 91)).astype(jnp.float32)
    loss2 = focal_loss_pallas(x2, t2)
    jax.block_until_ready(loss2)
    ref2 = focal_loss_ref(x2, t2)
    assert jnp.allclose(loss2, ref2, rtol=1e-5, atol=1e-6), (loss2, ref2)

    # 3) Multi-step reduction over the grid (small tile override exercises
    #    the resident-output accumulation across several blocks).
    x3 = jax.random.normal(k5, (2, 4, 32, 32), dtype=jnp.float32)
    t3 = jax.random.bernoulli(k6, p=0.3, shape=(2, 4, 32, 32)).astype(jnp.float32)
    loss3 = focal_loss_pallas(x3, t3, max_tile_rows=16)
    jax.block_until_ready(loss3)
    ref3 = focal_loss_ref(x3, t3)
    assert jnp.allclose(loss3, ref3, rtol=1e-5, atol=1e-6), (loss3, ref3)

    # 4) Multi-step + ragged: partial final block while accumulating across steps.
    loss4 = focal_loss_pallas(x2, t2, max_tile_rows=8)
    jax.block_until_ready(loss4)
    assert jnp.allclose(loss4, ref2, rtol=1e-5, atol=1e-6), (loss4, ref2)

    print("KERNEL_OK")
</pallas_src>

<mosaic_0001>
module attributes {stable_mosaic.version = 11 : i64} {
  func.func @kernel(%arg0: i32, %arg1: memref<16x128xf32, #tpu.memory_space<vmem>>, %arg2: memref<16x128xf32, #tpu.memory_space<vmem>>, %arg3: memref<8x128xf32, #tpu.memory_space<vmem>>) attributes {dimension_semantics = [#tpu.dimension_semantics<arbitrary>], iteration_bounds = array<i64: 1>, scalar_prefetch = 0 : i64, scratch_operands = 0 : i64, tpu.core_type = #tpu.core_type<tc>, window_params = [{transform_indices = @transform_0, window_bounds = array<i64: 16, 128>}, {transform_indices = @transform_1, window_bounds = array<i64: 16, 128>}, {pipeline_mode = #tpu.pipeline_mode<synchronous>, transform_indices = @transform_2, window_bounds = array<i64: 8, 128>}]} {
    %c0_i32 = arith.constant 0 : i32
    %0 = arith.cmpi eq, %arg0, %c0_i32 : i32
    %1 = arith.extui %0 : i1 to i32
    %c0_i32_0 = arith.constant 0 : i32
    %2 = arith.cmpi ne, %1, %c0_i32_0 : i32
    scf.if %2 {
      %cst_14 = arith.constant 0.000000e+00 : f32
      %32 = vector.broadcast %cst_14 : f32 to vector<8x128xf32>
      %c0_15 = arith.constant 0 : index
      %c0_16 = arith.constant 0 : index
      %33 = vector.load %arg3[%c0_15, %c0_16] : memref<8x128xf32, #tpu.memory_space<vmem>>, vector<8x128xf32>
      tpu.vector_store %arg3[%c0_15, %c0_16], %32 {strides = array<i32>} : memref<8x128xf32, #tpu.memory_space<vmem>>, vector<8x128xf32>,
    } else {
    }
    %c0 = arith.constant 0 : index
    %c0_1 = arith.constant 0 : index
    %3 = vector.load %arg1[%c0, %c0_1] : memref<16x128xf32, #tpu.memory_space<vmem>>, vector<16x128xf32>
    %c0_2 = arith.constant 0 : index
    %c0_3 = arith.constant 0 : index
    %4 = vector.load %arg2[%c0_2, %c0_3] : memref<16x128xf32, #tpu.memory_space<vmem>>, vector<16x128xf32>
    %5 = math.absf %3 : vector<16x128xf32>
    %cst = arith.constant 0.000000e+00 : f32
    %6 = vector.broadcast %cst : f32 to vector<16x128xf32>
    %7 = arith.subf %6, %5 : vector<16x128xf32>
    %8 = math.exp %7 : vector<16x128xf32>
    %cst_4 = arith.constant 0.000000e+00 : f32
    %9 = vector.broadcast %cst_4 : f32 to vector<16x128xf32>
    %10 = arith.maximumf %3, %9 : vector<16x128xf32>
    %11 = arith.mulf %3, %4 : vector<16x128xf32>
    %12 = arith.subf %10, %11 : vector<16x128xf32>
    %13 = math.log1p %8 : vector<16x128xf32>
    %14 = arith.addf %12, %13 : vector<16x128xf32>
    %cst_5 = arith.constant 0.000000e+00 : f32
    %15 = vector.broadcast %cst_5 : f32 to vector<16x128xf32>
    %16 = arith.subf %15, %14 : vector<16x128xf32>
    %17 = math.exp %16 : vector<16x128xf32>
    %cst_6 = arith.constant -5.000000e-01 : f32
    %18 = vector.broadcast %cst_6 : f32 to vector<16x128xf32>
    %19 = arith.mulf %18, %4 : vector<16x128xf32>
    %cst_7 = arith.constant 7.500000e-01 : f32
    %20 = vector.broadcast %cst_7 : f32 to vector<16x128xf32>
    %21 = arith.addf %20, %19 : vector<16x128xf32>
    %cst_8 = arith.constant 1.000000e+00 : f32
    %22 = vector.broadcast %cst_8 : f32 to vector<16x128xf32>
    %23 = arith.subf %22, %17 : vector<16x128xf32>
    %24 = arith.mulf %23, %23 : vector<16x128xf32>
    %25 = arith.mulf %21, %24 : vector<16x128xf32>
    %26 = arith.mulf %25, %14 : vector<16x128xf32>
    %27 = vector.shape_cast %26 : vector<16x128xf32> to vector<2x8x128xf32>
    %cst_9 = arith.constant dense<0.000000e+00> : vector<8x128xf32>
    %28 = vector.multi_reduction <add>, %27, %cst_9 [0] : vector<2x8x128xf32> to vector<8x128xf32>
    %c0_10 = arith.constant 0 : index
    %c0_11 = arith.constant 0 : index
    %29 = vector.load %arg3[%c0_10, %c0_11] : memref<8x128xf32, #tpu.memory_space<vmem>>, vector<8x128xf32>
    %30 = arith.addf %29, %28 : vector<8x128xf32>
    %c0_12 = arith.constant 0 : index
    %c0_13 = arith.constant 0 : index
    %31 = vector.load %arg3[%c0_12, %c0_13] : memref<8x128xf32, #tpu.memory_space<vmem>>, vector<8x128xf32>
    tpu.vector_store %arg3[%c0_12, %c0_13], %30 {strides = array<i32>} : memref<8x128xf32, #tpu.memory_space<vmem>>, vector<8x128xf32>,
    return
  }
  func.func @transform_0(%arg0: i32) -> (i32, i32) {
    %c0_i32 = arith.constant 0 : i32
    %c0_i32_0 = arith.constant 0 : i32
    return %arg0, %c0_i32 : i32, i32
  }
  func.func @transform_1(%arg0: i32) -> (i32, i32) {
    %c0_i32 = arith.constant 0 : i32
    %c0_i32_0 = arith.constant 0 : i32
    return %arg0, %c0_i32 : i32, i32
  }
  func.func @transform_2(%arg0: i32) -> (i32, i32) {
    %c0_i32 = arith.constant 0 : i32
    %c0_i32_0 = arith.constant 0 : i32
    %c0_i32_1 = arith.constant 0 : i32
    return %c0_i32, %c0_i32_0 : i32, i32
  }
}

</mosaic_0001>

<llo_original>
// kernel: tpu_custom_call.1
$region0: #{tpu_custom_call.1}
  #allocation0 [shape = 'u32[]', space=smem, size = 0x4, offset = 0x4, fixed_abs, tag = 'smem constant byte address 0x4 - core index']
  #allocation1 [shape = 'u32[144,128]{1,0:T(1,128)}', space=vmem, size = 0x12000, scoped, tag = 'internal scratch']
  %s0 = inlined_call_operand.hbm [shape: f32[16,128], index: 0, kind: input, shape index: {}]
  %s1 = inlined_call_operand.hbm [shape: f32[16,128], index: 1, kind: input, shape index: {}]
  %s2 = inlined_call_operand.hbm [shape: f32[8,128], index: 2, kind: output, shape index: {}]
  %s3 = sld [smem:[#allocation0]]
  $region30: #{tpu_custom_call.1} parent=0
    _
  %s5 = ssub.s32 1, %s3
  %s6 = scalar_select 0, %s5, %s3
  $region1: #{tpu_custom_call.1} parent=0
    #allocation2 [shape = 'u8[8192]{0}', space=vmem, size = 0x2000, scoped, tag = 'input window, operand 0, single buffered']
    #allocation3 [shape = 's32[1]{0}', space=sflag, size = 0x4, scoped, tag = 'scoped memory for tpu_custom_call.1']
    #allocation4 [shape = 's32[1]{0}', space=sflag, size = 0x4, scoped, tag = 'scoped memory for tpu_custom_call.1']
    #allocation5 [shape = 'u8[8192]{0}', space=vmem, size = 0x2000, scoped, tag = 'input window, operand 1, single buffered']
    #allocation6 [shape = 's32[1]{0}', space=sflag, size = 0x4, scoped, tag = 'scoped memory for tpu_custom_call.1']
    #allocation7 [shape = 'u8[4096]{0}', space=vmem, size = 0x1000, scoped, tag = 'output window, operand 0, single buffered']
    %7 = vsyncpa [#allocation3], 0
    %8 = vsyncpa [#allocation6], 0
    %9 = vsyncpa [#allocation4], 0
    // Predicated region
    $region2: #{tpu_custom_call.1} parent=1 // pred_check
      _
    $region3: #{tpu_custom_call.1} parent=1 // pred_check_branch
      %11 = sbr.rel (0) target = $region5
    $region4: #{tpu_custom_call.1} parent=1 // pred_region
      %s13 = ssub.s32 256, 256
      %14 = vsyncadd [#allocation3], %s13
      %s15 = sshll.u32 [#allocation2], 4
      %s16 = int_to_ptr.vmem [resolvable:$true] %s15
      %21 = dma.hbm_to_vmem [thread:$0]  %s0, 256, %s16, [#allocation3], 128, 128, 8
    $region5: #{tpu_custom_call.1} parent=1 // pred_fallthru
      _
    // Predicated region
    $region6: #{tpu_custom_call.1} parent=1 // pred_check
      _
    $region7: #{tpu_custom_call.1} parent=1 // pred_check_branch
      %23 = sbr.rel (0) target = $region9
    $region8: #{tpu_custom_call.1} parent=1 // pred_region
      %s25 = ssub.s32 256, 256
      %26 = vsyncadd [#allocation6], %s25
      %s27 = sshll.u32 [#allocation5], 4
      %s28 = int_to_ptr.vmem [resolvable:$true] %s27
      %33 = dma.hbm_to_vmem [thread:$0]  %s1, 256, %s28, [#allocation6], 128, 128, 8
    $region9: #{tpu_custom_call.1} parent=1 // pred_fallthru
      _
    // Predicated region
    $region10: #{tpu_custom_call.1} parent=1 // pred_check
      _
    $region11: #{tpu_custom_call.1} parent=1 // pred_check_branch
      %35 = sbr.rel (0) target = $region13
    $region12: #{tpu_custom_call.1} parent=1 // pred_region
      %36 = dma.done [#allocation3], 256
    $region13: #{tpu_custom_call.1} parent=1 // pred_fallthru
      _
    // Predicated region
    $region14: #{tpu_custom_call.1} parent=1 // pred_check
      _
    $region15: #{tpu_custom_call.1} parent=1 // pred_check_branch
      %38 = sbr.rel (0) target = $region17
    $region16: #{tpu_custom_call.1} parent=1 // pred_region
      %39 = dma.done [#allocation6], 256
    $region17: #{tpu_custom_call.1} parent=1 // pred_fallthru
      _
    %p40 = scmp.eq.s32.totalorder 0, 0
    // Predicated region
    $region18: #{tpu_custom_call.1} parent=1 // pred_check
      %p41 = pneg %p40
    $region19: #{tpu_custom_call.1} parent=1 // pred_check_branch
      %43 = sbr.rel (%p41) target = $region21
    $region20: #{tpu_custom_call.1} parent=1 // pred_region
      %44 = vst [vmem:[#allocation7] sm:$0xff] 0.0
    $region21: #{tpu_custom_call.1} parent=1 // pred_fallthru
      _
    %v45 = vld [vmem:[#allocation2] sm:$0xff]
    %v46 = vld [vmem:[#allocation2 + $0x8] sm:$0xff]
    %v47 = vld [vmem:[#allocation5] sm:$0xff]
    %v48 = vld [vmem:[#allocation5 + $0x8] sm:$0xff]
    %v49 = vand.u32 2147483647, %v45
    %v50 = vand.u32 2147483647, %v46
    %v51 = vsub.f32 0.0, %v49
    %v52 = vsub.f32 0.0, %v50
    %v53 = vmul.f32 %v51, 1.442695
    %v54 = vpow.pop %v53
    %v55 = vmul.f32 %v52, 1.442695
    %v56 = vpow.pop %v55
    %v57 = vmax.f32 %v45, 0.0
    %v58 = vmax.f32 %v46, 0.0
    %v59 = vmul.f32 %v45, %v47
    %v60 = vmul.f32 %v46, %v48
    %v61 = vsub.f32 %v57, %v59
    %v62 = vsub.f32 %v58, %v60
    %v63 = vadd.f32 %v54, 1.0
    %v64 = vlog2.pop %v63
    %v65 = vmul.f32 %v64, 0.6931472
    %v66 = vmul.f32 -0.5, %v54
    %v67 = vadd.f32 %v66, 1.0
    %v68 = vmul.f32 %v67, %v54
    %v69 = vand.u32 2147483647, %v54
    %vm70 = vcmp.lt.f32.partialorder %v69, 0.0004427343
    %v71 = vsel %vm70, %v68, %v65
    %v72 = vadd.f32 %v56, 1.0
    %v73 = vlog2.pop %v72
    %v74 = vmul.f32 %v73, 0.6931472
    %v75 = vmul.f32 -0.5, %v56
    %v76 = vadd.f32 %v75, 1.0
    %v77 = vmul.f32 %v76, %v56
    %v78 = vand.u32 2147483647, %v56
    %vm79 = vcmp.lt.f32.partialorder %v78, 0.0004427343
    %v80 = vsel %vm79, %v77, %v74
    %v81 = vadd.f32 %v61, %v71
    %v82 = vadd.f32 %v62, %v80
    %v83 = vsub.f32 0.0, %v81
    %v84 = vsub.f32 0.0, %v82
    %v85 = vmul.f32 %v83, 1.442695
    %v86 = vpow.pop %v85
    %v87 = vmul.f32 %v84, 1.442695
    %v88 = vpow.pop %v87
    %v89 = vmul.f32 %v47, -0.5
    %v90 = vmul.f32 %v48, -0.5
    %v91 = vadd.f32 %v89, 0.75
    %v92 = vadd.f32 %v90, 0.75
    %v93 = vsub.f32 1.0, %v86
    %v94 = vsub.f32 1.0, %v88
    %v95 = vmul.f32 %v93, %v93
    %v96 = vmul.f32 %v94, %v94
    %v97 = vmul.f32 %v91, %v95
    %v98 = vmul.f32 %v92, %v96
    %v99 = vmul.f32 %v97, %v81
    %v100 = vmul.f32 %v98, %v82
    %v101 = vadd.f32 %v99, %v100
    %v102 = vld [vmem:[#allocation7] sm:$0xff]
    %v103 = vadd.f32 %v102, %v101
    %104 = vst [vmem:[#allocation7] sm:$0xff] %v103
    // Predicated region
    $region22: #{tpu_custom_call.1} parent=1 // pred_check
      _
    $region23: #{tpu_custom_call.1} parent=1 // pred_check_branch
      %106 = sbr.rel (0) target = $region25
    $region24: #{tpu_custom_call.1} parent=1 // pred_region
      %s108 = ssub.s32 128, 128
      %109 = vsyncadd [#allocation4], %s108
      %s111 = sshll.u32 [#allocation7], 4
      %s112 = int_to_ptr.vmem [resolvable:$true] %s111
      %114 = dma.vmem_to_hbm [thread:$0]  %s112, 128, %s2, [#allocation4]
    $region25: #{tpu_custom_call.1} parent=1 // pred_fallthru
      _
    // Predicated region
    $region26: #{tpu_custom_call.1} parent=1 // pred_check
      _
    $region27: #{tpu_custom_call.1} parent=1 // pred_check_branch
      %116 = sbr.rel (0) target = $region29
    $region28: #{tpu_custom_call.1} parent=1 // pred_region
      %117 = dma.done [#allocation4], 128
    $region29: #{tpu_custom_call.1} parent=1 // pred_fallthru
      _
    %118 = vsyncpa [#allocation3], 1
    %119 = vsyncpa [#allocation6], 1
    %120 = vsyncpa [#allocation4], 1

</llo_original>
